<compile_context>
chip_gen: v7x
topology: tpu7x:2x2x1
jax: 0.10.0
libtpu: 0.0.40
codegen_flags: <defaults>
</compile_context>

<pallas_src>
import functools

import jax
import jax.numpy as jnp
from jax.experimental import pallas as pl
from jax.experimental.pallas import tpu as pltpu


def _round_up(n, m):
    return ((n + m - 1) // m) * m


# ---------------------------------------------------------------------------
# One-time (per parameter set) host-side weight fusion.
# ---------------------------------------------------------------------------
def prepare_fused_params(params, weights_dtype=jnp.bfloat16):
    """Fuse the 4 two-layer heads into two wide matmuls.

    Call ONCE per parameter set and reuse across forward calls; this is
    deliberately kept out of the per-call path.
    """
    f32 = jnp.float32
    H = params["chern_w1"].shape[1]
    assert H % 4 == 0, "hidden_dim must be divisible by 4"
    h_widths = (H // 2, H // 2, H // 4, H // 2)          # chern, z2, gap, sym
    o_widths = (1, 4, 1, 32)
    h_total, o_total = sum(h_widths), sum(o_widths)
    h_pad = _round_up(h_total, 128)
    o_pad = _round_up(o_total, 128)

    # ---- first layer: one concatenate + one pad (z2 scaled for the
    #      sigmoid(z) = 0.5*tanh(z/2) + 0.5 fold) ----
    w1_all = jnp.concatenate(
        [params["chern_w1"].astype(f32).T,
         0.5 * params["z2_w1"].astype(f32).T,
         params["gap_w1"].astype(f32).T,
         params["sym_w1"].astype(f32).T], axis=1)
    b1_all = jnp.concatenate(
        [params["chern_b1"].astype(f32),
         0.5 * params["z2_b1"].astype(f32),
         params["gap_b1"].astype(f32),
         params["sym_b1"].astype(f32)], axis=0)
    w1_all = jnp.pad(w1_all, ((0, 0), (0, h_pad - h_total)))
    b1_all = jnp.pad(b1_all, (0, h_pad - h_total))[None, :]

    # ---- second layer: block-diagonal, z2 rows carry the 0.5*t part and
    #      b2 absorbs the +0.5 part of the sigmoid fold ----
    w2_z2 = params["z2_w2"].astype(f32)                  # (4, H//2), PyTorch (out,in)
    w2_all = jax.scipy.linalg.block_diag(
        params["chern_w2"].astype(f32).T,
        0.5 * w2_z2.T,
        params["gap_w2"].astype(f32).T,
        params["sym_w2"].astype(f32).T)
    b2_all = jnp.concatenate(
        [params["chern_b2"].astype(f32),
         params["z2_b2"].astype(f32) + 0.5 * w2_z2.sum(axis=1),
         params["gap_b2"].astype(f32),
         params["sym_b2"].astype(f32)], axis=0)
    w2_all = jnp.pad(w2_all, ((0, h_pad - h_total), (0, o_pad - o_total)))
    b2_all = jnp.pad(b2_all, (0, o_pad - o_total))[None, :]

    return {
        "w1": w1_all.astype(weights_dtype),
        "b1": b1_all,
        "w2": w2_all.astype(weights_dtype),
        "b2": b2_all,
        "n_tanh": H,            # chern (H//2) + z2 (H//2) lanes use tanh
        "hidden_dim": H,
        "h_pad": h_pad,
        "o_pad": o_pad,
        "o_widths": o_widths,
    }


# ---------------------------------------------------------------------------
# Kernel
# ---------------------------------------------------------------------------
def _topo_fused_kernel(x_ref, w1_ref, b1_ref, w2_ref, b2_ref, out_ref, *, n_tanh):
    """x:(TB,H)  w1:(H,HP)  b1:(1,HP)  w2:(HP,OP)  b2:(1,OP)  out:(TB,OP)."""
    w1 = w1_ref[...]
    x = x_ref[...].astype(w1.dtype)
    h = jnp.dot(x, w1, preferred_element_type=jnp.float32) + b1_ref[...]

    # Single lane-index select: tanh for lanes [0, n_tanh), relu otherwise.
    # NOTE: the relu fallback also covers the zero-padded lanes [h_total, HP):
    # relu(0) == 0 and the matching rows of w2 are zero, so padding never
    # leaks into real outputs.  If head order / activations change, revisit.
    lane = jax.lax.broadcasted_iota(jnp.int32, h.shape, dimension=1)
    h_act = jnp.where(lane < n_tanh, jnp.tanh(h), jnp.maximum(h, 0.0))

    w2 = w2_ref[...]
    out = jnp.dot(h_act.astype(w2.dtype), w2,
                  preferred_element_type=jnp.float32) + b2_ref[...]
    out_ref[...] = out.astype(out_ref.dtype)


# ---------------------------------------------------------------------------
# Wrapper
# ---------------------------------------------------------------------------
def topological_feature_extractor(x, fused, *, batch_tile=256):
    """x: (B, H).  fused: output of prepare_fused_params (reused across calls)."""
    B, H = x.shape
    assert H == fused["hidden_dim"]
    h_pad, o_pad = fused["h_pad"], fused["o_pad"]
    out_dtype = x.dtype

    # Batch tile: multiple of 8 sublanes; 256-row tiles keep double-buffered
    # x/out tiles + resident weights well under v7x's 32 MiB scoped VMEM.
    tb = min(batch_tile, _round_up(B, 8))
    b_pad = _round_up(B, tb)
    if b_pad != B:
        x = jnp.pad(x, ((0, b_pad - B), (0, 0)))
    grid = (b_pad // tb,)

    kernel = functools.partial(_topo_fused_kernel, n_tanh=fused["n_tanh"])

    w_item = fused["w1"].dtype.itemsize
    cost = pl.CostEstimate(
        flops=2 * b_pad * (H * h_pad + h_pad * o_pad),
        transcendentals=b_pad * fused["n_tanh"],
        bytes_accessed=(x.dtype.itemsize * b_pad * H
                        + w_item * (H * h_pad + h_pad * o_pad)
                        + 4 * (h_pad + o_pad)
                        + jnp.dtype(out_dtype).itemsize * b_pad * o_pad),
    )

    out = pl.pallas_call(
        kernel,
        out_shape=jax.ShapeDtypeStruct((b_pad, o_pad), out_dtype),
        grid=grid,
        in_specs=[
            pl.BlockSpec((tb, H), lambda i: (i, 0)),       # x: streamed per step
            pl.BlockSpec((H, h_pad), lambda i: (0, 0)),    # fused weights: resident
            pl.BlockSpec((1, h_pad), lambda i: (0, 0)),
            pl.BlockSpec((h_pad, o_pad), lambda i: (0, 0)),
            pl.BlockSpec((1, o_pad), lambda i: (0, 0)),
        ],
        out_specs=pl.BlockSpec((tb, o_pad), lambda i: (i, 0)),
        compiler_params=pltpu.CompilerParams(
            dimension_semantics=("parallel",)),            # v7x: 2-TC batch shard
        cost_estimate=cost,
    )(x, fused["w1"], fused["b1"], fused["w2"], fused["b2"])

    out = out[:B]
    # Cheap slices of the single lane-dense slab.  `combined` is lanes [0:6]
    # by construction of the fused output column order, so no concatenate.
    sym_w = fused["o_widths"][3]
    return {
        "chern": out[:, 0:1],
        "z2": out[:, 1:5],
        "gap": out[:, 5:6],
        "symmetry": out[:, 6:6 + sym_w],
        "combined": out[:, 0:6],
    }


# ---------------------------------------------------------------------------
# Pure-JAX reference + deterministic init
# ---------------------------------------------------------------------------
def _reference(x, params):
    def lin(h, w, b):
        return h @ w.T + b
    chern = lin(jnp.tanh(lin(x, params["chern_w1"], params["chern_b1"])),
                params["chern_w2"], params["chern_b2"])
    z2 = lin(jax.nn.sigmoid(lin(x, params["z2_w1"], params["z2_b1"])),
             params["z2_w2"], params["z2_b2"])
    gap = lin(jax.nn.relu(lin(x, params["gap_w1"], params["gap_b1"])),
              params["gap_w2"], params["gap_b2"])
    sym = lin(jax.nn.relu(lin(x, params["sym_w1"], params["sym_b1"])),
              params["sym_w2"], params["sym_b2"])
    return {"chern": chern, "z2": z2, "gap": gap, "symmetry": sym,
            "combined": jnp.concatenate([chern, z2, gap], axis=1)}


def init_params(key, hidden_dim):
    """PyTorch-style uniform +-1/sqrt(fan_in) init, (out, in) weight layout."""
    shapes = {
        "chern_w1": (hidden_dim // 2, hidden_dim), "chern_b1": (hidden_dim // 2,),
        "chern_w2": (1, hidden_dim // 2),          "chern_b2": (1,),
        "z2_w1": (hidden_dim // 2, hidden_dim),    "z2_b1": (hidden_dim // 2,),
        "z2_w2": (4, hidden_dim // 2),             "z2_b2": (4,),
        "gap_w1": (hidden_dim // 4, hidden_dim),   "gap_b1": (hidden_dim // 4,),
        "gap_w2": (1, hidden_dim // 4),            "gap_b2": (1,),
        "sym_w1": (32, hidden_dim // 2),           "sym_b1": (32,),
    }
    # fix sym naming to match module: first layer (H//2, H), second (32, H//2)
    shapes["sym_w1"] = (hidden_dim // 2, hidden_dim)
    shapes["sym_b1"] = (hidden_dim // 2,)
    shapes["sym_w2"] = (32, hidden_dim // 2)
    shapes["sym_b2"] = (32,)
    params = {}
    keys = jax.random.split(key, len(shapes))
    for k, (name, shape) in zip(keys, sorted(shapes.items())):
        fan_in = shape[-1] if len(shape) == 2 else shapes[name.replace("_b", "_w")][-1]
        bound = 1.0 / (fan_in ** 0.5)
        params[name] = jax.random.uniform(k, shape, jnp.float32, -bound, bound)
    return params


if __name__ == "__main__":
    key = jax.random.PRNGKey(0)
    k_x, k_p, k_x2 = jax.random.split(key, 3)

    B, H = 8, 32  # small shapes: batch=8, hidden=32
    x = jax.random.normal(k_x, (B, H), dtype=jnp.float32)
    params = init_params(k_p, H)
    ref = _reference(x, params)

    # Exact-math mode (f32 fused weights): tight tolerance.
    fused_f32 = prepare_fused_params(params, weights_dtype=jnp.float32)
    out = topological_feature_extractor(x, fused_f32)
    jax.block_until_ready(out)
    for name in ("chern", "z2", "gap", "symmetry", "combined"):
        assert out[name].shape == ref[name].shape, name
        assert jnp.allclose(out[name], ref[name], atol=1e-4, rtol=1e-4), name

    # Default bf16-weight mode (for the mem-bound large-B regime): bf16 tolerance.
    fused_bf16 = prepare_fused_params(params)
    out16 = topological_feature_extractor(x, fused_bf16)
    jax.block_until_ready(out16)
    for name in ("chern", "z2", "gap", "symmetry", "combined"):
        assert out16[name].shape == ref[name].shape, name
        assert jnp.allclose(out16[name], ref[name], atol=5e-2, rtol=5e-2), name

    # Multi-step grid + ragged batch (B=300 -> tb=256, grid=(2,), padded tail).
    B2 = 300
    x2 = jax.random.normal(k_x2, (B2, H), dtype=jnp.float32)
    ref2 = _reference(x2, params)
    out2 = topological_feature_extractor(x2, fused_bf16)
    jax.block_until_ready(out2)
    for name in ("chern", "z2", "gap", "symmetry", "combined"):
        assert out2[name].shape == ref2[name].shape, name
        assert jnp.allclose(out2[name], ref2[name], atol=5e-2, rtol=5e-2), name

    print("KERNEL_OK")
</pallas_src>

<mosaic_0001>
module attributes {stable_mosaic.version = 11 : i64} {
  func.func @_topo_fused_kernel(%arg0: i32, %arg1: memref<8x32xf32, #tpu.memory_space<vmem>>, %arg2: memref<32x128xf32, #tpu.memory_space<vmem>>, %arg3: memref<1x128xf32, #tpu.memory_space<vmem>>, %arg4: memref<128x128xf32, #tpu.memory_space<vmem>>, %arg5: memref<1x128xf32, #tpu.memory_space<vmem>>, %arg6: memref<8x128xf32, #tpu.memory_space<vmem>>) attributes {dimension_semantics = [#tpu.dimension_semantics<parallel>], iteration_bounds = array<i64: 1>, scalar_prefetch = 0 : i64, scratch_operands = 0 : i64, tpu.core_type = #tpu.core_type<tc>, window_params = [{transform_indices = @transform_0, window_bounds = array<i64: 8, 32>}, {pipeline_mode = #tpu.pipeline_mode<synchronous>, transform_indices = @transform_1, window_bounds = array<i64: 32, 128>}, {pipeline_mode = #tpu.pipeline_mode<synchronous>, transform_indices = @transform_2, window_bounds = array<i64: 1, 128>}, {pipeline_mode = #tpu.pipeline_mode<synchronous>, transform_indices = @transform_3, window_bounds = array<i64: 128, 128>}, {pipeline_mode = #tpu.pipeline_mode<synchronous>, transform_indices = @transform_4, window_bounds = array<i64: 1, 128>}, {transform_indices = @transform_5, window_bounds = array<i64: 8, 128>}]} {
    %c0 = arith.constant 0 : index
    %c0_0 = arith.constant 0 : index
    %0 = vector.load %arg2[%c0, %c0_0] : memref<32x128xf32, #tpu.memory_space<vmem>>, vector<32x128xf32>
    %c0_1 = arith.constant 0 : index
    %c0_2 = arith.constant 0 : index
    %1 = vector.load %arg1[%c0_1, %c0_2] : memref<8x32xf32, #tpu.memory_space<vmem>>, vector<8x32xf32>
    %cst = arith.constant dense<0.000000e+00> : vector<8x128xf32>
    %2 = tpu.matmul %1, %0, %cst {dimension_numbers = #tpu.dot_dimension_numbers<[1], [0], [0], [1], [0, 0, 1, 1], [], []>} : vector<8x32xf32>, vector<32x128xf32>, vector<8x128xf32> -> vector<8x128xf32>
    %c0_3 = arith.constant 0 : index
    %c0_4 = arith.constant 0 : index
    %3 = vector.load %arg3[%c0_3, %c0_4] : memref<1x128xf32, #tpu.memory_space<vmem>>, vector<1x128xf32>
    %4 = vector.broadcast %3 : vector<1x128xf32> to vector<8x128xf32>
    %5 = arith.addf %2, %4 : vector<8x128xf32>
    %6 = tpu.iota {dimensions = array<i32: 1>} : vector<8x128xi32>
    %c32_i32 = arith.constant 32 : i32
    %7 = vector.broadcast %c32_i32 : i32 to vector<8x128xi32>
    %8 = arith.cmpi slt, %6, %7 : vector<8x128xi32>
    %9 = math.tanh %5 : vector<8x128xf32>
    %cst_5 = arith.constant 0.000000e+00 : f32
    %10 = vector.broadcast %cst_5 : f32 to vector<8x128xf32>
    %11 = arith.maximumf %5, %10 : vector<8x128xf32>
    %12 = arith.select %8, %9, %11 : vector<8x128xi1>, vector<8x128xf32>
    %c0_6 = arith.constant 0 : index
    %c0_7 = arith.constant 0 : index
    %13 = vector.load %arg4[%c0_6, %c0_7] : memref<128x128xf32, #tpu.memory_space<vmem>>, vector<128x128xf32>
    %cst_8 = arith.constant dense<0.000000e+00> : vector<8x128xf32>
    %14 = tpu.matmul %12, %13, %cst_8 {dimension_numbers = #tpu.dot_dimension_numbers<[1], [0], [0], [1], [0, 0, 1, 1], [], []>} : vector<8x128xf32>, vector<128x128xf32>, vector<8x128xf32> -> vector<8x128xf32>
    %c0_9 = arith.constant 0 : index
    %c0_10 = arith.constant 0 : index
    %15 = vector.load %arg5[%c0_9, %c0_10] : memref<1x128xf32, #tpu.memory_space<vmem>>, vector<1x128xf32>
    %16 = vector.broadcast %15 : vector<1x128xf32> to vector<8x128xf32>
    %17 = arith.addf %14, %16 : vector<8x128xf32>
    %c0_11 = arith.constant 0 : index
    %c0_12 = arith.constant 0 : index
    %18 = vector.load %arg6[%c0_11, %c0_12] : memref<8x128xf32, #tpu.memory_space<vmem>>, vector<8x128xf32>
    tpu.vector_store %arg6[%c0_11, %c0_12], %17 {strides = array<i32>} : memref<8x128xf32, #tpu.memory_space<vmem>>, vector<8x128xf32>,
    return
  }
  func.func @transform_0(%arg0: i32) -> (i32, i32) {
    %c0_i32 = arith.constant 0 : i32
    %c0_i32_0 = arith.constant 0 : i32
    return %arg0, %c0_i32 : i32, i32
  }
  func.func @transform_1(%arg0: i32) -> (i32, i32) {
    %c0_i32 = arith.constant 0 : i32
    %c0_i32_0 = arith.constant 0 : i32
    %c0_i32_1 = arith.constant 0 : i32
    return %c0_i32, %c0_i32_0 : i32, i32
  }
  func.func @transform_2(%arg0: i32) -> (i32, i32) {
    %c0_i32 = arith.constant 0 : i32
    %c0_i32_0 = arith.constant 0 : i32
    %c0_i32_1 = arith.constant 0 : i32
    return %c0_i32, %c0_i32_0 : i32, i32
  }
  func.func @transform_3(%arg0: i32) -> (i32, i32) {
    %c0_i32 = arith.constant 0 : i32
    %c0_i32_0 = arith.constant 0 : i32
    %c0_i32_1 = arith.constant 0 : i32
    return %c0_i32, %c0_i32_0 : i32, i32
  }
  func.func @transform_4(%arg0: i32) -> (i32, i32) {
    %c0_i32 = arith.constant 0 : i32
    %c0_i32_0 = arith.constant 0 : i32
    %c0_i32_1 = arith.constant 0 : i32
    return %c0_i32, %c0_i32_0 : i32, i32
  }
  func.func @transform_5(%arg0: i32) -> (i32, i32) {
    %c0_i32 = arith.constant 0 : i32
    %c0_i32_0 = arith.constant 0 : i32
    return %arg0, %c0_i32 : i32, i32
  }
}

</mosaic_0001>

<llo_original>
// kernel: tpu_custom_call.1
$region0: #{tpu_custom_call.1}
  #allocation0 [shape = 'u32[]', space=smem, size = 0x4, offset = 0x4, fixed_abs, tag = 'smem constant byte address 0x4 - core index']
  #allocation1 [shape = 'u32[144,128]{1,0:T(1,128)}', space=vmem, size = 0x12000, scoped, tag = 'internal scratch']
  %s0 = inlined_call_operand.hbm [shape: f32[8,32], index: 0, kind: input, shape index: {}]
  %s1 = inlined_call_operand.hbm [shape: f32[32,128], index: 1, kind: input, shape index: {}]
  %s2 = inlined_call_operand.vmem [shape: f32[1,128], index: 2, kind: input, shape index: {}]
  %s3 = inlined_call_operand.hbm [shape: f32[128,128], index: 3, kind: input, shape index: {}]
  %s4 = inlined_call_operand.vmem [shape: f32[1,128], index: 4, kind: input, shape index: {}]
  %s5 = inlined_call_operand.hbm [shape: f32[8,128], index: 5, kind: output, shape index: {}]
  %s6 = sld [smem:[#allocation0]]
  $region42: #{tpu_custom_call.1} parent=0
    _
  %s8 = ssub.s32 1, %s6
  %s9 = scalar_select 0, %s8, %s6
  $region1: #{tpu_custom_call.1} parent=0
    #allocation2 [shape = 'u8[4096]{0}', space=vmem, size = 0x1000, scoped, tag = 'input window, operand 0, single buffered']
    #allocation3 [shape = 's32[1]{0}', space=sflag, size = 0x4, scoped, tag = 'scoped memory for tpu_custom_call.1']
    #allocation4 [shape = 's32[1]{0}', space=sflag, size = 0x4, scoped, tag = 'scoped memory for tpu_custom_call.1']
    #allocation5 [shape = 'u8[16384]{0}', space=vmem, size = 0x4000, scoped, tag = 'input window, operand 1, single buffered']
    #allocation6 [shape = 's32[1]{0}', space=sflag, size = 0x4, scoped, tag = 'scoped memory for tpu_custom_call.1']
    #allocation7 [shape = 'u8[65536]{0}', space=vmem, size = 0x10000, scoped, tag = 'input window, operand 3, single buffered']
    #allocation8 [shape = 'u8[4096]{0}', space=vmem, size = 0x1000, scoped, tag = 'output window, operand 0, single buffered']
    %10 = vsyncpa [#allocation3], 0
    %11 = vsyncpa [#allocation6], 0
    %12 = vsyncpa [#allocation4], 0
    // Predicated region
    $region2: #{tpu_custom_call.1} parent=1 // pred_check
      _
    $region3: #{tpu_custom_call.1} parent=1 // pred_check_branch
      %14 = sbr.rel (0) target = $region5
    $region4: #{tpu_custom_call.1} parent=1 // pred_region
      %s16 = ssub.s32 128, 128
      %17 = vsyncadd [#allocation3], %s16
      %s19 = sshll.u32 [#allocation2], 4
      %s20 = int_to_ptr.vmem [resolvable:$true] %s19
      %22 = dma.hbm_to_vmem [thread:$0]  %s0, 128, %s20, [#allocation3]
    $region5: #{tpu_custom_call.1} parent=1 // pred_fallthru
      _
    // Predicated region
    $region6: #{tpu_custom_call.1} parent=1 // pred_check
      _
    $region7: #{tpu_custom_call.1} parent=1 // pred_check_branch
      %24 = sbr.rel (0) target = $region9
    $region8: #{tpu_custom_call.1} parent=1 // pred_region
      %s26 = ssub.s32 512, 512
      %27 = vsyncadd [#allocation6], %s26
      %s28 = sshll.u32 [#allocation5], 4
      %s29 = int_to_ptr.vmem [resolvable:$true] %s28
      %34 = dma.hbm_to_vmem [thread:$0]  %s1, 512, %s29, [#allocation6], 128, 128, 8
    $region9: #{tpu_custom_call.1} parent=1 // pred_fallthru
      _
    // Predicated region
    $region10: #{tpu_custom_call.1} parent=1 // pred_check
      _
    $region11: #{tpu_custom_call.1} parent=1 // pred_check_branch
      %36 = sbr.rel (0) target = $region13
    $region12: #{tpu_custom_call.1} parent=1 // pred_region
      _
    $region13: #{tpu_custom_call.1} parent=1 // pred_fallthru
      _
    // Predicated region
    $region14: #{tpu_custom_call.1} parent=1 // pred_check
      _
    $region15: #{tpu_custom_call.1} parent=1 // pred_check_branch
      %38 = sbr.rel (0) target = $region17
    $region16: #{tpu_custom_call.1} parent=1 // pred_region
      %s40 = ssub.s32 2048, 2048
      %41 = vsyncadd [#allocation6], %s40
      %s42 = sshll.u32 [#allocation7], 4
      %s43 = int_to_ptr.vmem [resolvable:$true] %s42
      %48 = dma.hbm_to_vmem [thread:$0]  %s3, 2048, %s43, [#allocation6], 128, 128, 8
    $region17: #{tpu_custom_call.1} parent=1 // pred_fallthru
      _
    // Predicated region
    $region18: #{tpu_custom_call.1} parent=1 // pred_check
      _
    $region19: #{tpu_custom_call.1} parent=1 // pred_check_branch
      %50 = sbr.rel (0) target = $region21
    $region20: #{tpu_custom_call.1} parent=1 // pred_region
      _
    $region21: #{tpu_custom_call.1} parent=1 // pred_fallthru
      _
    // Predicated region
    $region22: #{tpu_custom_call.1} parent=1 // pred_check
      _
    $region23: #{tpu_custom_call.1} parent=1 // pred_check_branch
      %52 = sbr.rel (0) target = $region25
    $region24: #{tpu_custom_call.1} parent=1 // pred_region
      %53 = dma.done [#allocation3], 128
    $region25: #{tpu_custom_call.1} parent=1 // pred_fallthru
      _
    // Predicated region
    $region26: #{tpu_custom_call.1} parent=1 // pred_check
      _
    $region27: #{tpu_custom_call.1} parent=1 // pred_check_branch
      %55 = sbr.rel (0) target = $region29
    $region28: #{tpu_custom_call.1} parent=1 // pred_region
      %56 = dma.done [#allocation6], 512
    $region29: #{tpu_custom_call.1} parent=1 // pred_fallthru
      _
    // Predicated region
    $region30: #{tpu_custom_call.1} parent=1 // pred_check
      _
    $region31: #{tpu_custom_call.1} parent=1 // pred_check_branch
      %58 = sbr.rel (0) target = $region33
    $region32: #{tpu_custom_call.1} parent=1 // pred_region
      %59 = dma.done [#allocation6], 2048
    $region33: #{tpu_custom_call.1} parent=1 // pred_fallthru
      _
    %v60 = vld [vmem:[#allocation5] sm:$0xff]
    %v61 = vld [vmem:[#allocation5 + $0x8] sm:$0xff]
    %v62 = vld [vmem:[#allocation5 + $0x10] sm:$0xff]
    %v63 = vld [vmem:[#allocation5 + $0x18] sm:$0xff]
    %v64 = vld [vmem:[#allocation2] sm:$0xff]
    %v65 = vld [vmem:[%s2] sm:$0x1]
    %v67 = vlaneseq
    %v68 = vshrl.u32 %v67, 7
    %v69 = vsub.s32 0, %v68
    %v70 = vrot.slane %v65, %v69
    %vm72 = vcmask 261120
    %v74 = vsel %vm72, %v64, 0
    %76 = vmatprep.subr.mxu0 0.0
    %77 = vmatpush1.msra.mxu0 %v60
    %78 = vmatprep.subr.mxu0 0.0
    %79 = vmatpush1.msra.mxu0 %v61
    %80 = vmatprep.subr.mxu0 0.0
    %81 = vmatpush1.msra.mxu0 %v62
    %82 = vmatprep.subr.mxu0 0.0
    %83 = vmatpush1.msra.mxu0 %v63
    %84 = vmatprep.subr.mxu0 0.0
    %85 = vmatpush1.msra.mxu0 0.0
    %86 = vmatprep.subr.mxu0 0.0
    %87 = vmatpush1.msra.mxu0 0.0
    %88 = vmatprep.subr.mxu0 0.0
    %89 = vmatpush1.msra.mxu0 0.0
    %90 = vmatprep.subr.mxu0 0.0
    %91 = vmatpush1.msra.mxu0 0.0
    %92 = vmatprep.subr.mxu0 0.0
    %93 = vmatpush1.msra.mxu0 0.0
    %94 = vmatprep.subr.mxu0 0.0
    %95 = vmatpush1.msra.mxu0 0.0
    %96 = vmatprep.subr.mxu0 0.0
    %97 = vmatpush1.msra.mxu0 0.0
    %98 = vmatprep.subr.mxu0 0.0
    %99 = vmatpush1.msra.mxu0 0.0
    %100 = vmatprep.subr.mxu0 0.0
    %101 = vmatpush1.msra.mxu0 0.0
    %102 = vmatprep.subr.mxu0 0.0
    %103 = vmatpush1.msra.mxu0 0.0
    %104 = vmatprep.subr.mxu0 0.0
    %105 = vmatpush1.msra.mxu0 0.0
    %106 = vmatprep.subr.mxu0 0.0
    %107 = vmatpush1.msra.mxu0 0.0
    %108 = vmatprep.subr.mxu0 0.0
    %109 = vmatpush1.msra.mxu0 0.0
    %110 = vmatprep.subr.mxu0 0.0
    %111 = vmatpush1.msra.mxu0 0.0
    %112 = vmatprep.subr.mxu0 0.0
    %113 = vmatpush1.msra.mxu0 0.0
    %114 = vmatprep.subr.mxu0 0.0
    %115 = vmatpush1.msra.mxu0 0.0
    %116 = vmatprep.subr.mxu0 0.0
    %117 = vmatpush1.msra.mxu0 0.0
    %118 = vmatprep.subr.mxu0 0.0
    %119 = vmatpush1.msra.mxu0 0.0
    %120 = vmatprep.subr.mxu0 0.0
    %121 = vmatpush1.msra.mxu0 0.0
    %122 = vmatprep.subr.mxu0 0.0
    %123 = vmatpush1.msra.mxu0 0.0
    %124 = vmatprep.subr.mxu0 0.0
    %125 = vmatpush1.msra.mxu0 0.0
    %126 = vmatprep.subr.mxu0 0.0
    %127 = vmatpush1.msra.mxu0 0.0
    %128 = vmatprep.subr.mxu0 0.0
    %129 = vmatpush1.msra.mxu0 0.0
    %130 = vmatprep.subr.mxu0 0.0
    %131 = vmatpush1.msra.mxu0 0.0
    %132 = vmatprep.subr.mxu0 0.0
    %133 = vmatpush1.msra.mxu0 0.0
    %134 = vmatprep.subr.mxu0 0.0
    %135 = vmatpush1.msra.mxu0 0.0
    %136 = vmatprep.subr.mxu0 0.0
    %137 = vmatpush1.msra.mxu0 0.0
    %138 = vmatprep.subr.mxu0 0.0
    %139 = vmatpush1.msra.mxu0 0.0
    %140 = vmatprep.mubr.f32.mxu0 0.0
    %141 = vmatmul.mubr.f32.gmra.mrb[0].mxu0 %v74
    %v142 = vpop.f32.mrb[0].mxu0
    %v143 = vadd.f32 %v70, %v142
    %v144 = vpop.f32.mrb[0].mxu0
    %145 = vdwg.mxu0
    %v146 = vlaneseq
    %v147 = vand.u32 %v146, 127
    %vm148 = vcmp.lt.s32.totalorder %v147, 32
    %v149 = vtanh.pop %v143
    %v150 = vmax.f32 %v143, 0.0
    %v151 = vsel %vm148, %v149, %v150
    %v152 = vld [vmem:[#allocation7] sm:$0xff]
    %v153 = vld [vmem:[#allocation7 + $0x8] sm:$0xff]
    %v154 = vld [vmem:[#allocation7 + $0x10] sm:$0xff]
    %v155 = vld [vmem:[#allocation7 + $0x18] sm:$0xff]
    %v156 = vld [vmem:[#allocation7 + $0x20] sm:$0xff]
    %v157 = vld [vmem:[#allocation7 + $0x28] sm:$0xff]
    %v158 = vld [vmem:[#allocation7 + $0x30] sm:$0xff]
    %v159 = vld [vmem:[#allocation7 + $0x38] sm:$0xff]
    %v160 = vld [vmem:[#allocation7 + $0x40] sm:$0xff]
    %v161 = vld [vmem:[#allocation7 + $0x48] sm:$0xff]
    %v162 = vld [vmem:[#allocation7 + $0x50] sm:$0xff]
    %v163 = vld [vmem:[#allocation7 + $0x58] sm:$0xff]
    %v164 = vld [vmem:[#allocation7 + $0x60] sm:$0xff]
    %v165 = vld [vmem:[#allocation7 + $0x68] sm:$0xff]
    %v166 = vld [vmem:[#allocation7 + $0x70] sm:$0xff]
    %v167 = vld [vmem:[#allocation7 + $0x78] sm:$0xff]
    %v168 = vld [vmem:[%s4] sm:$0x1]
    %v170 = vlaneseq
    %v171 = vshrl.u32 %v170, 7
    %v172 = vsub.s32 0, %v171
    %v173 = vrot.slane %v168, %v172
    %175 = vmatprep.subr.mxu0 0.0
    %176 = vmatpush1.msra.mxu0 %v152
    %177 = vmatprep.subr.mxu0 0.0
    %178 = vmatpush1.msra.mxu0 %v153
    %179 = vmatprep.subr.mxu0 0.0
    %180 = vmatpush1.msra.mxu0 %v154
    %181 = vmatprep.subr.mxu0 0.0
    %182 = vmatpush1.msra.mxu0 %v155
    %183 = vmatprep.subr.mxu0 0.0
    %184 = vmatpush1.msra.mxu0 %v156
    %185 = vmatprep.subr.mxu0 0.0
    %186 = vmatpush1.msra.mxu0 %v157
    %187 = vmatprep.subr.mxu0 0.0
    %188 = vmatpush1.msra.mxu0 %v158
    %189 = vmatprep.subr.mxu0 0.0
    %190 = vmatpush1.msra.mxu0 %v159
    %191 = vmatprep.subr.mxu0 0.0
    %192 = vmatpush1.msra.mxu0 %v160
    %193 = vmatprep.subr.mxu0 0.0
    %194 = vmatpush1.msra.mxu0 %v161
    %195 = vmatprep.subr.mxu0 0.0
    %196 = vmatpush1.msra.mxu0 %v162
    %197 = vmatprep.subr.mxu0 0.0
    %198 = vmatpush1.msra.mxu0 %v163
    %199 = vmatprep.subr.mxu0 0.0
    %200 = vmatpush1.msra.mxu0 %v164
    %201 = vmatprep.subr.mxu0 0.0
    %202 = vmatpush1.msra.mxu0 %v165
    %203 = vmatprep.subr.mxu0 0.0
    %204 = vmatpush1.msra.mxu0 %v166
    %205 = vmatprep.subr.mxu0 0.0
    %206 = vmatpush1.msra.mxu0 %v167
    %207 = vmatprep.subr.mxu0 0.0
    %208 = vmatpush1.msra.mxu0 0.0
    %209 = vmatprep.subr.mxu0 0.0
    %210 = vmatpush1.msra.mxu0 0.0
    %211 = vmatprep.subr.mxu0 0.0
    %212 = vmatpush1.msra.mxu0 0.0
    %213 = vmatprep.subr.mxu0 0.0
    %214 = vmatpush1.msra.mxu0 0.0
    %215 = vmatprep.subr.mxu0 0.0
    %216 = vmatpush1.msra.mxu0 0.0
    %217 = vmatprep.subr.mxu0 0.0
    %218 = vmatpush1.msra.mxu0 0.0
    %219 = vmatprep.subr.mxu0 0.0
    %220 = vmatpush1.msra.mxu0 0.0
    %221 = vmatprep.subr.mxu0 0.0
    %222 = vmatpush1.msra.mxu0 0.0
    %223 = vmatprep.subr.mxu0 0.0
    %224 = vmatpush1.msra.mxu0 0.0
    %225 = vmatprep.subr.mxu0 0.0
    %226 = vmatpush1.msra.mxu0 0.0
    %227 = vmatprep.subr.mxu0 0.0
    %228 = vmatpush1.msra.mxu0 0.0
    %229 = vmatprep.subr.mxu0 0.0
    %230 = vmatpush1.msra.mxu0 0.0
    %231 = vmatprep.subr.mxu0 0.0
    %232 = vmatpush1.msra.mxu0 0.0
    %233 = vmatprep.subr.mxu0 0.0
    %234 = vmatpush1.msra.mxu0 0.0
    %235 = vmatprep.subr.mxu0 0.0
    %236 = vmatpush1.msra.mxu0 0.0
    %237 = vmatprep.subr.mxu0 0.0
    %238 = vmatpush1.msra.mxu0 0.0
    %239 = vmatprep.mubr.f32.mxu0 0.0
    %240 = vmatmul.mubr.f32.gmra.mrb[0].mxu0 %v151
    %v241 = vpop.f32.mrb[0].mxu0
    %v242 = vadd.f32 %v173, %v241
    %v243 = vpop.f32.mrb[0].mxu0
    %244 = vdwg.mxu0
    %245 = vst [vmem:[#allocation8] sm:$0xff] %v242
    // Predicated region
    $region34: #{tpu_custom_call.1} parent=1 // pred_check
      _
    $region35: #{tpu_custom_call.1} parent=1 // pred_check_branch
      %247 = sbr.rel (0) target = $region37
    $region36: #{tpu_custom_call.1} parent=1 // pred_region
      %s249 = ssub.s32 128, 128
      %250 = vsyncadd [#allocation4], %s249
      %s252 = sshll.u32 [#allocation8], 4
      %s253 = int_to_ptr.vmem [resolvable:$true] %s252
      %255 = dma.vmem_to_hbm [thread:$0]  %s253, 128, %s5, [#allocation4]
    $region37: #{tpu_custom_call.1} parent=1 // pred_fallthru
      _
    // Predicated region
    $region38: #{tpu_custom_call.1} parent=1 // pred_check
      _
    $region39: #{tpu_custom_call.1} parent=1 // pred_check_branch
      %257 = sbr.rel (0) target = $region41
    $region40: #{tpu_custom_call.1} parent=1 // pred_region
      %258 = dma.done [#allocation4], 128
    $region41: #{tpu_custom_call.1} parent=1 // pred_fallthru
      _
    %259 = vsyncpa [#allocation3], 1
    %260 = vsyncpa [#allocation6], 1
    %261 = vsyncpa [#allocation4], 1

</llo_original>
